<compile_context>
chip_gen: v6e
topology: v6e:2x2x1
jax: 0.10.0
libtpu: 0.0.40
codegen_flags: <defaults>
</compile_context>

<pallas_src>
import jax
import jax.numpy as jnp
from jax.experimental import pallas as pl
from jax.experimental.pallas import tpu as pltpu

_LANES = 128


def _round_up(x, m):
    return ((x + m - 1) // m) * m


def _device_vmem_capacity_bytes():
    """Physical per-core VMEM, with a conservative (v7x-sized) fallback."""
    try:
        cap = getattr(pltpu.get_tpu_info(), "vmem_capacity_bytes", None)
        if cap:
            return int(cap)
    except Exception:
        pass
    return 64 * 1024 * 1024  # v7x per-TensorCore VMEM (smallest current gen)


def _choose_tiling(rows, hidden, dtype):
    """Pick (tile_rows, vmem_limit_bytes) from a per-generation byte budget."""
    itemsize = jnp.dtype(dtype).itemsize
    row_bytes = hidden * itemsize

    # ~75% of physical per-core VMEM: 96 MiB on v5e/v6e (128 MiB), 48 MiB on
    # v7x (64 MiB). Cap at 100 MiB to keep headroom for Mosaic internals.
    vmem_limit = min((_device_vmem_capacity_bytes() * 3) // 4, 100 * 1024 * 1024)

    # Budget for the double-buffered activation stream; the [1, hidden] weight
    # row, the lane-dense output blocks and internal scratch fit in the slack.
    x_stream_budget = max(vmem_limit - 4 * 1024 * 1024, 2 * _LANES * row_bytes)
    budget_rows = x_stream_budget // (2 * row_bytes)

    # Byte-based tile target (not a flat row cap): >= 16 MiB of activation
    # bytes per grid step, bounded above by the VMEM budget.
    target_rows = (16 * 1024 * 1024) // row_bytes

    tile = min(budget_rows, max(target_rows, 8 * _LANES))
    tile = max(_LANES, (tile // _LANES) * _LANES)
    # No point tiling wider than the lane-padded row count.
    tile = min(tile, _round_up(rows, _LANES))

    # Make sure the stated scoped limit covers the chosen tile (tiny problems /
    # extreme hidden sizes).
    vmem_limit = max(vmem_limit, 2 * tile * row_bytes + 4 * 1024 * 1024)
    return int(tile), int(vmem_limit)


def _linear_head_kernel(x_ref, w_ref, b_ref, o_ref):
    # x_ref: [tile_rows, hidden] (VMEM)    w_ref: [1, hidden] (VMEM, resident)
    # b_ref: [1, 1] f32 (SMEM)             o_ref: [1, 1, tile_rows] (VMEM)
    #
    # Contract over hidden with the weight as the LHS so the MXU result lands
    # lane-dense as [1, tile_rows] (the standard q @ k.T dimension numbers);
    # this avoids a [tile_rows, 1] column and the masked stores / degenerate
    # writeback DMAs that come with it.
    logits = jax.lax.dot_general(
        w_ref[...], x_ref[...],
        dimension_numbers=(((1,), (1,)), ((), ())),
        preferred_element_type=jnp.float32,
    )                                            # [1, tile_rows] f32
    logits = logits + b_ref[0, 0]
    o_ref[...] = logits.reshape(o_ref.shape).astype(o_ref.dtype)


def linear_head_forward(hidden_states, weight, bias, *, tile_rows=None):
    """Pallas implementation of LinearHead.forward (nn.Linear(hidden_size, 1)).

    Args:
      hidden_states: [batch, seq, hidden]
      weight: [1, hidden]   (PyTorch nn.Linear weight layout)
      bias:   [1]
    Returns:
      logits: [batch, seq, 1]
    """
    b, s, h = hidden_states.shape
    rows = b * s
    act_dtype = hidden_states.dtype
    itemsize = jnp.dtype(act_dtype).itemsize

    auto_tile, vmem_limit = _choose_tiling(rows, h, act_dtype)
    if tile_rows is None:
        tile_rows = auto_tile
    else:
        tile_rows = max(_LANES, _round_up(int(tile_rows), _LANES))

    num_tiles = pl.cdiv(rows, tile_rows)

    x2d = hidden_states.reshape(rows, h)
    # Lane-dense weight row in the activation dtype (tiny, resident in VMEM).
    w_row = weight.reshape(1, h).astype(act_dtype)
    # Bias as a (1,1) f32 scalar placed in SMEM.
    b2d = bias.reshape(1, 1).astype(jnp.float32)

    cost = pl.CostEstimate(
        flops=2 * rows * h,
        transcendentals=0,
        bytes_accessed=rows * h * itemsize + h * itemsize + rows * itemsize,
    )

    out3d = pl.pallas_call(
        _linear_head_kernel,
        out_shape=jax.ShapeDtypeStruct((num_tiles, 1, tile_rows), act_dtype),
        grid_spec=pltpu.PrefetchScalarGridSpec(
            num_scalar_prefetch=0,
            grid=(num_tiles,),
            in_specs=[
                # Row tile of activations (the only real HBM traffic); partial
                # last block is masked by Pallas.
                pl.BlockSpec((tile_rows, h), lambda i: (i, 0)),
                # Full lane-dense weight row, resident across all grid steps.
                pl.BlockSpec((1, h), lambda i: (0, 0)),
                # Bias scalar, whole array in SMEM.
                pl.BlockSpec(memory_space=pltpu.MemorySpace.SMEM),
            ],
            # Lane-dense output slab: one [1, tile_rows] row per grid step.
            out_specs=pl.BlockSpec((1, 1, tile_rows), lambda i: (i, 0, 0)),
        ),
        compiler_params=pltpu.CompilerParams(
            # One row axis; on v7x this shards across both TensorCores.
            dimension_semantics=("parallel",),
            vmem_limit_bytes=vmem_limit,
        ),
        cost_estimate=cost,
    )(x2d, w_row, b2d)

    # Padded tail rows (if any) carry garbage from the masked partial block;
    # they are sliced off here.
    out_flat = out3d.reshape(num_tiles * tile_rows)
    return out_flat[:rows].reshape(b, s, 1)


if __name__ == "__main__":
    key = jax.random.PRNGKey(0)
    k_x, k_w, k_x2, k_x3 = jax.random.split(key, 4)

    batch, seq, hidden = 2, 8, 32

    # Deterministic parameter init mirroring LinearHead.__init__:
    #   weight ~ Normal(0, 0.01), bias = 0
    weight = 0.01 * jax.random.normal(k_w, (1, hidden), dtype=jnp.float32)
    bias = jnp.zeros((1,), dtype=jnp.float32)

    # Main check: f32 activations.
    hidden_states = jax.random.normal(k_x, (batch, seq, hidden), dtype=jnp.float32)
    logits = linear_head_forward(hidden_states, weight, bias)
    jax.block_until_ready(logits)
    ref = hidden_states @ weight.T + bias
    assert logits.shape == (batch, seq, 1)
    assert jnp.allclose(logits, ref, atol=1e-5, rtol=1e-5)

    # Rows not a multiple of the tile (exercises cdiv + implicit masking of the
    # partial block and the wrapper-side slice of padded output rows).
    hs2 = jax.random.normal(k_x2, (3, 7, hidden), dtype=jnp.float32)
    logits2 = linear_head_forward(hs2, weight, bias)
    jax.block_until_ready(logits2)
    ref2 = hs2 @ weight.T + bias
    assert logits2.shape == (3, 7, 1)
    assert jnp.allclose(logits2, ref2, atol=1e-5, rtol=1e-5)

    # Multi-tile grid (explicit small tile) to exercise the lane-dense output
    # index map across several grid steps plus a partial final block.
    hs3 = jax.random.normal(k_x3, (3, 100, hidden), dtype=jnp.float32)
    logits3 = linear_head_forward(hs3, weight, bias, tile_rows=128)
    jax.block_until_ready(logits3)
    ref3 = hs3 @ weight.T + bias
    assert logits3.shape == (3, 100, 1)
    assert jnp.allclose(logits3, ref3, atol=1e-5, rtol=1e-5)

    print("KERNEL_OK")
</pallas_src>

<mosaic_0001>
module attributes {stable_mosaic.version = 11 : i64} {
  func.func @_linear_head_kernel(%arg0: i32, %arg1: memref<128x32xf32, #tpu.memory_space<vmem>>, %arg2: memref<1x32xf32, #tpu.memory_space<vmem>>, %arg3: memref<1x1xf32, #tpu.memory_space<smem>>, %arg4: memref<1x1x128xf32, #tpu.memory_space<vmem>>) attributes {dimension_semantics = [#tpu.dimension_semantics<parallel>], iteration_bounds = array<i64: 1>, scalar_prefetch = 0 : i64, scratch_operands = 0 : i64, tpu.core_type = #tpu.core_type<tc>, window_params = [{transform_indices = @transform_0, window_bounds = array<i64: 128, 32>}, {pipeline_mode = #tpu.pipeline_mode<synchronous>, transform_indices = @transform_1, window_bounds = array<i64: 1, 32>}, {transform_indices = @transform_2, window_bounds = array<i64: 1, 1>}, {transform_indices = @transform_3, window_bounds = array<i64: 1, 1, 128>}]} {
    %c0 = arith.constant 0 : index
    %c0_0 = arith.constant 0 : index
    %0 = vector.load %arg2[%c0, %c0_0] : memref<1x32xf32, #tpu.memory_space<vmem>>, vector<1x32xf32>
    %c0_1 = arith.constant 0 : index
    %c0_2 = arith.constant 0 : index
    %1 = vector.load %arg1[%c0_1, %c0_2] : memref<128x32xf32, #tpu.memory_space<vmem>>, vector<128x32xf32>
    %cst = arith.constant dense<0.000000e+00> : vector<1x128xf32>
    %2 = tpu.matmul %0, %1, %cst {dimension_numbers = #tpu.dot_dimension_numbers<[1], [1], [0], [0], [0, 0, 1, 0], [], []>} : vector<1x32xf32>, vector<128x32xf32>, vector<1x128xf32> -> vector<1x128xf32>
    %c0_3 = arith.constant 0 : index
    %c0_4 = arith.constant 0 : index
    %3 = memref.load %arg3[%c0_3, %c0_4] : memref<1x1xf32, #tpu.memory_space<smem>>
    %4 = vector.broadcast %3 : f32 to vector<1x128xf32>
    %5 = arith.addf %2, %4 : vector<1x128xf32>
    %6 = vector.shape_cast %5 : vector<1x128xf32> to vector<1x1x128xf32>
    %c0_5 = arith.constant 0 : index
    %c0_6 = arith.constant 0 : index
    %c0_7 = arith.constant 0 : index
    %7 = vector.load %arg4[%c0_5, %c0_6, %c0_7] : memref<1x1x128xf32, #tpu.memory_space<vmem>>, vector<1x1x128xf32>
    tpu.vector_store %arg4[%c0_5, %c0_6, %c0_7], %6 {strides = array<i32>} : memref<1x1x128xf32, #tpu.memory_space<vmem>>, vector<1x1x128xf32>,
    return
  }
  func.func @transform_0(%arg0: i32) -> (i32, i32) {
    %c0_i32 = arith.constant 0 : i32
    %c0_i32_0 = arith.constant 0 : i32
    return %arg0, %c0_i32 : i32, i32
  }
  func.func @transform_1(%arg0: i32) -> (i32, i32) {
    %c0_i32 = arith.constant 0 : i32
    %c0_i32_0 = arith.constant 0 : i32
    %c0_i32_1 = arith.constant 0 : i32
    return %c0_i32, %c0_i32_0 : i32, i32
  }
  func.func @transform_2(%arg0: i32) -> (i32, i32) {
    %c0_i32 = arith.constant 0 : i32
    %c0_i32_0 = arith.constant 0 : i32
    %c0_i32_1 = arith.constant 0 : i32
    return %c0_i32, %c0_i32_0 : i32, i32
  }
  func.func @transform_3(%arg0: i32) -> (i32, i32, i32) {
    %c0_i32 = arith.constant 0 : i32
    %c0_i32_0 = arith.constant 0 : i32
    %c0_i32_1 = arith.constant 0 : i32
    return %arg0, %c0_i32, %c0_i32_0 : i32, i32, i32
  }
}

</mosaic_0001>

<llo_original>
// kernel: tpu_custom_call.1
$region0: #{tpu_custom_call.1}
  #allocation0 [shape = 'u32[]', space=smem, size = 0x4, offset = 0x4, fixed_abs, tag = 'smem constant byte address 0x4 - core index']
  #allocation1 [shape = 'u32[144,128]{1,0:T(1,128)}', space=vmem, size = 0x12000, scoped, tag = 'internal scratch']
  #allocation2 [shape = 'f32[1,1]{1,0:T(1,128)S(6)}', space=smem, size = 0x200, scoped, tag = 'scoped memory for tpu_custom_call.1']
  %s0 = inlined_call_operand.hbm [shape: f32[16,32], index: 0, kind: input, shape index: {}]
  %s1 = inlined_call_operand.vmem [shape: f32[1,32], index: 1, kind: input, shape index: {}]
  %s2 = inlined_call_operand.<no memory space> [shape: f32[1,1], index: 2, kind: input, shape index: {}]
  %s3 = inlined_call_operand.hbm [shape: f32[1,1,128], index: 3, kind: output, shape index: {}]
  %s4 = sld [smem:[#allocation0]]
  $region26: #{tpu_custom_call.1} parent=0
    _
  %s6 = ssub.s32 1, %s4
  %s7 = scalar_select 0, %s6, %s4
  %8 = sst [smem:[#allocation2]] %s2
  $region1: #{tpu_custom_call.1} parent=0
    #allocation3 [shape = 'u8[65536]{0}', space=vmem, size = 0x10000, scoped, tag = 'input window, operand 0, single buffered']
    #allocation4 [shape = 's32[1]{0}', space=sflag, size = 0x4, scoped, tag = 'scoped memory for tpu_custom_call.1']
    #allocation5 [shape = 's32[1]{0}', space=sflag, size = 0x4, scoped, tag = 'scoped memory for tpu_custom_call.1']
    #allocation6 [shape = 'u8[512]{0}', space=vmem, size = 0x400, scoped, tag = 'output window, operand 0, single buffered']
    %9 = vsyncpa [#allocation4], 0
    %10 = vsyncpa [#allocation5], 0
    // Predicated region
    $region2: #{tpu_custom_call.1} parent=1 // pred_check
      _
    $region3: #{tpu_custom_call.1} parent=1 // pred_check_branch
      %12 = sbr.rel (0) target = $region5
    $region4: #{tpu_custom_call.1} parent=1 // pred_region
      %s14 = ssub.s32 2048, 256
      %15 = vsyncadd [#allocation4], %s14
      %s16 = sshll.u32 [#allocation3], 4
      %s17 = int_to_ptr.vmem [resolvable:$true] %s16
      %22 = dma.hbm_to_vmem [thread:$0]  %s0, 256, %s17, [#allocation4], 128, 128, 8
    $region5: #{tpu_custom_call.1} parent=1 // pred_fallthru
      _
    // Predicated region
    $region6: #{tpu_custom_call.1} parent=1 // pred_check
      _
    $region7: #{tpu_custom_call.1} parent=1 // pred_check_branch
      %24 = sbr.rel (0) target = $region9
    $region8: #{tpu_custom_call.1} parent=1 // pred_region
      _
    $region9: #{tpu_custom_call.1} parent=1 // pred_fallthru
      _
    // Predicated region
    $region10: #{tpu_custom_call.1} parent=1 // pred_check
      _
    $region11: #{tpu_custom_call.1} parent=1 // pred_check_branch
      %26 = sbr.rel (0) target = $region13
    $region12: #{tpu_custom_call.1} parent=1 // pred_region
      _
    $region13: #{tpu_custom_call.1} parent=1 // pred_fallthru
      _
    // Predicated region
    $region14: #{tpu_custom_call.1} parent=1 // pred_check
      _
    $region15: #{tpu_custom_call.1} parent=1 // pred_check_branch
      %28 = sbr.rel (0) target = $region17
    $region16: #{tpu_custom_call.1} parent=1 // pred_region
      %29 = dma.done [#allocation4], 2048
    $region17: #{tpu_custom_call.1} parent=1 // pred_fallthru
      _
    %v30 = vld [vmem:[%s1] sm:$0x1]
    %v31 = vld [vmem:[#allocation3] sm:$0xff]
    %v32 = vld [vmem:[#allocation3 + $0x8] sm:$0xff]
    %v33 = vld [vmem:[#allocation3 + $0x10] sm:$0xff]
    %v34 = vld [vmem:[#allocation3 + $0x18] sm:$0xff]
    %v35 = vld [vmem:[#allocation3 + $0x20] sm:$0xff]
    %v36 = vld [vmem:[#allocation3 + $0x28] sm:$0xff]
    %v37 = vld [vmem:[#allocation3 + $0x30] sm:$0xff]
    %v38 = vld [vmem:[#allocation3 + $0x38] sm:$0xff]
    %v39 = vld [vmem:[#allocation3 + $0x40] sm:$0xff]
    %v40 = vld [vmem:[#allocation3 + $0x48] sm:$0xff]
    %v41 = vld [vmem:[#allocation3 + $0x50] sm:$0xff]
    %v42 = vld [vmem:[#allocation3 + $0x58] sm:$0xff]
    %v43 = vld [vmem:[#allocation3 + $0x60] sm:$0xff]
    %v44 = vld [vmem:[#allocation3 + $0x68] sm:$0xff]
    %v45 = vld [vmem:[#allocation3 + $0x70] sm:$0xff]
    %v46 = vld [vmem:[#allocation3 + $0x78] sm:$0xff]
    %s47 = sld [smem:[#allocation2]]
    %v48 = vstv %s47
    %vm49 = vcmask 261120
    %v51 = vsel %vm49, %v30, 0
    %v54 = vsel %vm49, %v31, 0
    %v57 = vsel %vm49, %v32, 0
    %v60 = vsel %vm49, %v33, 0
    %v63 = vsel %vm49, %v34, 0
    %v66 = vsel %vm49, %v35, 0
    %v69 = vsel %vm49, %v36, 0
    %v72 = vsel %vm49, %v37, 0
    %v75 = vsel %vm49, %v38, 0
    %v78 = vsel %vm49, %v39, 0
    %v81 = vsel %vm49, %v40, 0
    %v84 = vsel %vm49, %v41, 0
    %v87 = vsel %vm49, %v42, 0
    %v90 = vsel %vm49, %v43, 0
    %v93 = vsel %vm49, %v44, 0
    %v96 = vsel %vm49, %v45, 0
    %v99 = vsel %vm49, %v46, 0
    %101 = vmatprep.subr.mxu0 0.0
    %102 = vmatpush1.xpose.msra.mxu0 %v99
    %103 = vmatprep.subr.mxu0 0.0
    %104 = vmatpush1.xpose.msra.mxu0 %v96
    %105 = vmatprep.subr.mxu0 0.0
    %106 = vmatpush1.xpose.msra.mxu0 %v93
    %107 = vmatprep.subr.mxu0 0.0
    %108 = vmatpush1.xpose.msra.mxu0 %v90
    %109 = vmatprep.subr.mxu0 0.0
    %110 = vmatpush1.xpose.msra.mxu0 %v87
    %111 = vmatprep.subr.mxu0 0.0
    %112 = vmatpush1.xpose.msra.mxu0 %v84
    %113 = vmatprep.subr.mxu0 0.0
    %114 = vmatpush1.xpose.msra.mxu0 %v81
    %115 = vmatprep.subr.mxu0 0.0
    %116 = vmatpush1.xpose.msra.mxu0 %v78
    %117 = vmatprep.subr.mxu0 0.0
    %118 = vmatpush1.xpose.msra.mxu0 %v75
    %119 = vmatprep.subr.mxu0 0.0
    %120 = vmatpush1.xpose.msra.mxu0 %v72
    %121 = vmatprep.subr.mxu0 0.0
    %122 = vmatpush1.xpose.msra.mxu0 %v69
    %123 = vmatprep.subr.mxu0 0.0
    %124 = vmatpush1.xpose.msra.mxu0 %v66
    %125 = vmatprep.subr.mxu0 0.0
    %126 = vmatpush1.xpose.msra.mxu0 %v63
    %127 = vmatprep.subr.mxu0 0.0
    %128 = vmatpush1.xpose.msra.mxu0 %v60
    %129 = vmatprep.subr.mxu0 0.0
    %130 = vmatpush1.xpose.msra.mxu0 %v57
    %131 = vmatprep.subr.mxu0 0.0
    %132 = vmatpush1.xpose.msra.mxu0 %v54
    %133 = vmatprep.subr.mxu0 0.0
    %134 = vmatpush2.xpose.msra.mxu0 0.0
    %135 = vmatprep.subr.mxu0 0.0
    %136 = vmatpush2.xpose.msra.mxu0 0.0
    %137 = vmatprep.subr.mxu0 0.0
    %138 = vmatpush2.xpose.msra.mxu0 0.0
    %139 = vmatprep.subr.mxu0 0.0
    %140 = vmatpush2.xpose.msra.mxu0 0.0
    %141 = vmatprep.subr.mxu0 0.0
    %142 = vmatpush2.xpose.msra.mxu0 0.0
    %143 = vmatprep.subr.mxu0 0.0
    %144 = vmatpush2.xpose.msra.mxu0 0.0
    %145 = vmatprep.subr.mxu0 0.0
    %146 = vmatpush2.xpose.msra.mxu0 0.0
    %147 = vmatprep.subr.mxu0 0.0
    %148 = vmatpush2.xpose.msra.mxu0 0.0
    %149 = vmatprep.subr.mxu0 0.0
    %150 = vmatpush2.xpose.msra.mxu0 0.0
    %151 = vmatprep.subr.mxu0 0.0
    %152 = vmatpush2.xpose.msra.mxu0 0.0
    %153 = vmatprep.subr.mxu0 0.0
    %154 = vmatpush2.xpose.msra.mxu0 0.0
    %155 = vmatprep.subr.mxu0 0.0
    %156 = vmatpush2.xpose.msra.mxu0 0.0
    %157 = vmatprep.subr.mxu0 0.0
    %158 = vmatpush2.xpose.msra.mxu0 0.0
    %159 = vmatprep.subr.mxu0 0.0
    %160 = vmatpush2.xpose.msra.mxu0 0.0
    %161 = vmatprep.subr.mxu0 0.0
    %162 = vmatpush2.xpose.msra.mxu0 0.0
    %163 = vmatprep.subr.mxu0 0.0
    %164 = vmatpush2.xpose.msra.mxu0 0.0
    %165 = vmatprep.mubr.f32.mxu0 0.0
    %166 = vmatmul.mubr.f32.gmra.mxu0 %v51
    %v167 = vpop.f32.mrf.mxu0
    %v168 = vadd.f32 %v48, %v167
    %v169 = vpop.f32.mrf.mxu0
    %170 = vdwg.mxu0
    %171 = vst [vmem:[#allocation6] sm:$0x1] %v168
    // Predicated region
    $region18: #{tpu_custom_call.1} parent=1 // pred_check
      _
    $region19: #{tpu_custom_call.1} parent=1 // pred_check_branch
      %173 = sbr.rel (0) target = $region21
    $region20: #{tpu_custom_call.1} parent=1 // pred_region
      %s175 = ssub.s32 16, 16
      %176 = vsyncadd [#allocation5], %s175
      %s178 = sshll.u32 [#allocation6], 4
      %s179 = int_to_ptr.vmem [resolvable:$true] %s178
      %181 = dma.vmem_to_hbm [thread:$0]  %s179, 16, %s3, [#allocation5]
    $region21: #{tpu_custom_call.1} parent=1 // pred_fallthru
      _
    // Predicated region
    $region22: #{tpu_custom_call.1} parent=1 // pred_check
      _
    $region23: #{tpu_custom_call.1} parent=1 // pred_check_branch
      %183 = sbr.rel (0) target = $region25
    $region24: #{tpu_custom_call.1} parent=1 // pred_region
      %184 = dma.done [#allocation5], 16
    $region25: #{tpu_custom_call.1} parent=1 // pred_fallthru
      _
    %185 = vsyncpa [#allocation4], 1
    %186 = vsyncpa [#allocation5], 1

</llo_original>
